<compile_context>
chip_gen: v5e
topology: v5e:2x2
jax: 0.10.0
libtpu: 0.0.40
codegen_flags: <defaults>
</compile_context>

<pallas_src>
import functools
import math

import jax
import jax.numpy as jnp
from jax.experimental import pallas as pl
from jax.experimental.pallas import tpu as pltpu


# --------------------------------------------------------------------------
# Generation-aware tiling / VMEM budget
# --------------------------------------------------------------------------
def _make_hw_config():
    kind = ""
    try:
        kind = jax.devices()[0].device_kind.lower()
    except Exception:
        pass
    if "v7" in kind:                                   # 64 MiB VMEM, 2 TC/chip
        vmem_limit = 56 * 1024 * 1024
        ffn_tile_rows = 256
    elif any(v in kind for v in ("v4", "v5", "v6")):   # 128 MiB physical VMEM
        vmem_limit = 100 * 1024 * 1024
        ffn_tile_rows = 512
    else:
        vmem_limit = 32 * 1024 * 1024
        ffn_tile_rows = 256
    return dict(
        tile_rows=256,          # row tile for generic linears / LN
        ffn_tile_rows=ffn_tile_rows,
        tile_k=512,             # contraction-axis tile
        tile_n=512,             # output-feature-axis tile
        tile_seq=256,           # attention q/kv sequence tile
        vmem_limit=vmem_limit,
    )


_CFG = _make_hw_config()


def _row_tiling(rows, tile_rows):
    """Row tile + padded row count (pad only when actually tiling)."""
    if rows <= tile_rows:
        return rows, rows
    padded = pl.cdiv(rows, tile_rows) * tile_rows
    return tile_rows, padded


def _pick_divisor(n, target, multiple=128):
    """Largest lane-dense (multiple-of-`multiple`) divisor of n <= target.

    Falls back to the full dimension (always a legal block) if none exists.
    """
    if n <= target:
        return n
    start = target - (target % multiple)
    for d in range(start, 0, -multiple):
        if n % d == 0:
            return d
    return n


def _seq_tiling(t, target):
    if t <= target:
        return t, t
    padded = pl.cdiv(t, target) * target
    return target, padded


# --------------------------------------------------------------------------
# LayerNorm
# --------------------------------------------------------------------------
def _layernorm_kernel(x_ref, g_ref, b_ref, o_ref):
    x = x_ref[...].astype(jnp.float32)
    mean = jnp.mean(x, axis=-1, keepdims=True)
    xc = x - mean
    var = jnp.mean(xc * xc, axis=-1, keepdims=True)
    inv = jax.lax.rsqrt(var + 1e-5)
    y = xc * inv * g_ref[...].astype(jnp.float32) + b_ref[...].astype(jnp.float32)
    o_ref[...] = y.astype(o_ref.dtype)


def layer_norm(x, g, b, *, tile_rows=None):
    tile_rows = tile_rows or _CFG["tile_rows"]
    orig_shape = x.shape
    C = orig_shape[-1]
    x2 = x.reshape(-1, C)
    rows = x2.shape[0]
    tm, padded = _row_tiling(rows, tile_rows)
    if padded != rows:
        x2 = jnp.pad(x2, ((0, padded - rows), (0, 0)))

    out = pl.pallas_call(
        _layernorm_kernel,
        out_shape=jax.ShapeDtypeStruct((padded, C), x.dtype),
        grid_spec=pltpu.PrefetchScalarGridSpec(
            num_scalar_prefetch=0,
            grid=(padded // tm,),
            in_specs=[
                pl.BlockSpec((tm, C), lambda i: (i, 0)),
                pl.BlockSpec((1, C), lambda i: (0, 0)),
                pl.BlockSpec((1, C), lambda i: (0, 0)),
            ],
            out_specs=pl.BlockSpec((tm, C), lambda i: (i, 0)),
        ),
        compiler_params=pltpu.CompilerParams(
            dimension_semantics=("parallel",),
            vmem_limit_bytes=_CFG["vmem_limit"],
        ),
    )(x2, g.reshape(1, C), b.reshape(1, C))
    return out[:rows].reshape(orig_shape)


# --------------------------------------------------------------------------
# Linear: rows @ W (+ bias) (+ residual), N- and K-tiled, f32 VMEM accumulator
# --------------------------------------------------------------------------
def _linear_kernel(*refs, has_bias, has_residual, transpose_rhs):
    x_ref, w_ref = refs[0], refs[1]
    pos = 2
    if has_bias:
        b_ref = refs[pos]
        pos += 1
    if has_residual:
        r_ref = refs[pos]
        pos += 1
    o_ref, acc_ref = refs[pos], refs[pos + 1]

    k = pl.program_id(2)

    @pl.when(k == 0)
    def _():
        acc_ref[...] = jnp.zeros_like(acc_ref)

    if transpose_rhs:
        # x: (tm, tk), w: (tn, tk)  -> contract both on their last dim (no .T copy)
        part = jax.lax.dot_general(x_ref[...], w_ref[...],
                                   (((1,), (1,)), ((), ())),
                                   preferred_element_type=jnp.float32)
    else:
        part = jnp.dot(x_ref[...], w_ref[...],
                       preferred_element_type=jnp.float32)
    acc_ref[...] += part

    @pl.when(k == pl.num_programs(2) - 1)
    def _():
        out = acc_ref[...]
        if has_bias:
            out = out + b_ref[...].astype(jnp.float32)
        if has_residual:
            out = out + r_ref[...].astype(jnp.float32)
        o_ref[...] = out.astype(o_ref.dtype)


def linear(x2, w, b=None, *, residual=None, transpose_rhs=False,
           tile_rows=None, tile_k=None, tile_n=None, out_dtype=None):
    """x2: (rows, K).  w: (K, N), or (N, K) when transpose_rhs=True."""
    tile_rows = tile_rows or _CFG["tile_rows"]
    tile_k = tile_k or _CFG["tile_k"]
    tile_n = tile_n or _CFG["tile_n"]
    rows, K = x2.shape
    if transpose_rhs:
        N, Kw = w.shape
    else:
        Kw, N = w.shape
    assert K == Kw
    out_dtype = out_dtype or x2.dtype

    tm, padded = _row_tiling(rows, tile_rows)
    pad = padded - rows
    if pad:
        x2 = jnp.pad(x2, ((0, pad), (0, 0)))
        if residual is not None:
            residual = jnp.pad(residual, ((0, pad), (0, 0)))
    tk = _pick_divisor(K, tile_k)
    tn = _pick_divisor(N, tile_n)

    in_specs = [pl.BlockSpec((tm, tk), lambda i, j, k: (i, k))]
    if transpose_rhs:
        in_specs.append(pl.BlockSpec((tn, tk), lambda i, j, k: (j, k)))
    else:
        in_specs.append(pl.BlockSpec((tk, tn), lambda i, j, k: (k, j)))
    operands = [x2, w]
    if b is not None:
        in_specs.append(pl.BlockSpec((1, tn), lambda i, j, k: (0, j)))
        operands.append(b.reshape(1, N))
    if residual is not None:
        in_specs.append(pl.BlockSpec((tm, tn), lambda i, j, k: (i, j)))
        operands.append(residual)

    kernel = functools.partial(
        _linear_kernel,
        has_bias=b is not None,
        has_residual=residual is not None,
        transpose_rhs=transpose_rhs,
    )

    out = pl.pallas_call(
        kernel,
        out_shape=jax.ShapeDtypeStruct((padded, N), out_dtype),
        grid_spec=pltpu.PrefetchScalarGridSpec(
            num_scalar_prefetch=0,
            grid=(padded // tm, N // tn, K // tk),
            in_specs=in_specs,
            out_specs=pl.BlockSpec((tm, tn), lambda i, j, k: (i, j)),
            scratch_shapes=[pltpu.VMEM((tm, tn), jnp.float32)],
        ),
        compiler_params=pltpu.CompilerParams(
            dimension_semantics=("parallel", "parallel", "arbitrary"),
            vmem_limit_bytes=_CFG["vmem_limit"],
        ),
    )(*operands)
    return out[:rows] if pad else out


# --------------------------------------------------------------------------
# FeedForward: fused Linear -> GELU(erf) -> Linear (+ residual), H streamed
# --------------------------------------------------------------------------
def _ffn_kernel(*refs, has_residual):
    x_ref, w1_ref, b1_ref, w2_ref, b2_ref = refs[:5]
    pos = 5
    if has_residual:
        r_ref = refs[pos]
        pos += 1
    o_ref, acc_ref = refs[pos], refs[pos + 1]

    h_idx = pl.program_id(1)

    @pl.when(h_idx == 0)
    def _():
        acc_ref[...] = jnp.zeros_like(acc_ref)

    # c_fc partial: (TM, C) @ (C, TH); native-dtype operands, f32 accumulation.
    h = jnp.dot(x_ref[...], w1_ref[...], preferred_element_type=jnp.float32)
    h = h + b1_ref[...].astype(jnp.float32)
    # Exact erf-GELU (matches torch.nn.GELU() default), in f32 on the tile.
    h = 0.5 * h * (1.0 + jax.lax.erf(h * (1.0 / math.sqrt(2.0))))
    # c_proj partial: accumulate (TM, TH) @ (TH, C) into the f32 scratch.
    acc_ref[...] += jnp.dot(h.astype(w2_ref.dtype), w2_ref[...],
                            preferred_element_type=jnp.float32)

    @pl.when(h_idx == pl.num_programs(1) - 1)
    def _():
        # Dropout: inference-mode identity.
        # TODO(synk): training-mode dropout would need pltpu.prng_seed/prng_random_bits.
        out = acc_ref[...] + b2_ref[...].astype(jnp.float32)
        if has_residual:
            out = out + r_ref[...].astype(jnp.float32)
        o_ref[...] = out.astype(o_ref.dtype)


def feed_forward(x, w1, b1, w2, b2, *, residual=None, tile_rows=None, tile_h=512):
    tile_rows = tile_rows or _CFG["ffn_tile_rows"]
    B, T, C = x.shape
    H = w1.shape[1]
    rows = B * T
    x2 = x.reshape(rows, C)
    r2 = residual.reshape(rows, C) if residual is not None else None
    tm, padded = _row_tiling(rows, tile_rows)
    pad = padded - rows
    if pad:
        x2 = jnp.pad(x2, ((0, pad), (0, 0)))
        if r2 is not None:
            r2 = jnp.pad(r2, ((0, pad), (0, 0)))
    th = _pick_divisor(H, tile_h)

    in_specs = [
        pl.BlockSpec((tm, C), lambda i, h: (i, 0)),    # rows (resident over h)
        pl.BlockSpec((C, th), lambda i, h: (0, h)),    # W1 streamed over H
        pl.BlockSpec((1, th), lambda i, h: (0, h)),    # b1 slice
        pl.BlockSpec((th, C), lambda i, h: (h, 0)),    # W2 streamed over H
        pl.BlockSpec((1, C), lambda i, h: (0, 0)),     # b2 (finalize only)
    ]
    operands = [x2, w1, b1.reshape(1, H), w2, b2.reshape(1, C)]
    if r2 is not None:
        in_specs.append(pl.BlockSpec((tm, C), lambda i, h: (i, 0)))
        operands.append(r2)

    kernel = functools.partial(_ffn_kernel, has_residual=r2 is not None)

    out = pl.pallas_call(
        kernel,
        out_shape=jax.ShapeDtypeStruct((padded, C), x.dtype),
        grid_spec=pltpu.PrefetchScalarGridSpec(
            num_scalar_prefetch=0,
            grid=(padded // tm, H // th),
            in_specs=in_specs,
            out_specs=pl.BlockSpec((tm, C), lambda i, h: (i, 0)),
            scratch_shapes=[pltpu.VMEM((tm, C), jnp.float32)],
        ),
        compiler_params=pltpu.CompilerParams(
            dimension_semantics=("parallel", "arbitrary"),
            vmem_limit_bytes=_CFG["vmem_limit"],
        ),
    )(*operands)
    out = out[:rows] if pad else out
    return out.reshape(B, T, C)


# --------------------------------------------------------------------------
# Flash-style causal attention, heads processed in-kernel from (B, T, C)
# --------------------------------------------------------------------------
def _attn_kernel(q_ref, k_ref, v_ref, o_ref, m_ref, l_ref, acc_ref,
                 *, n_head, scale):
    kv_idx = pl.program_id(2)
    tq = q_ref.shape[1]
    tkv = k_ref.shape[1]
    C = q_ref.shape[2]
    hd = C // n_head
    q_start = pl.program_id(1) * tq
    k_start = kv_idx * tkv

    @pl.when(kv_idx == 0)
    def _():
        m_ref[...] = jnp.full(m_ref.shape, -jnp.inf, dtype=m_ref.dtype)
        l_ref[...] = jnp.zeros_like(l_ref)
        acc_ref[...] = jnp.zeros_like(acc_ref)

    # Skip fully-masked KV blocks (upper triangle): ~2x fewer score FLOPs.
    @pl.when(k_start <= q_start + tq - 1)
    def _():
        q = q_ref[0]                               # (tq, C)
        k = k_ref[0]                               # (tkv, C)
        v = v_ref[0]                               # (tkv, C)
        row = q_start + jax.lax.broadcasted_iota(jnp.int32, (tq, tkv), 0)
        col = k_start + jax.lax.broadcasted_iota(jnp.int32, (tq, tkv), 1)
        mask = col <= row
        for h in range(n_head):                    # static loop, all heads per step
            qh = q[:, h * hd:(h + 1) * hd]
            kh = k[:, h * hd:(h + 1) * hd]
            vh = v[:, h * hd:(h + 1) * hd]
            # q @ k^T without materializing a transpose (contract on head dim).
            s = jax.lax.dot_general(qh, kh, (((1,), (1,)), ((), ())),
                                    preferred_element_type=jnp.float32) * scale
            s = jnp.where(mask, s, -1e30)          # f32 scores, safe constant
            m_prev = m_ref[h]
            m_new = jnp.maximum(m_prev, jnp.max(s, axis=-1, keepdims=True))
            alpha = jnp.exp(m_prev - m_new)
            p = jnp.exp(s - m_new)
            l_ref[h] = alpha * l_ref[h] + jnp.sum(p, axis=-1, keepdims=True)
            acc_ref[h] = alpha * acc_ref[h] + jnp.dot(
                p.astype(vh.dtype), vh, preferred_element_type=jnp.float32)
            m_ref[h] = m_new

    @pl.when(kv_idx == pl.num_programs(2) - 1)
    def _():
        inv_l = pl.reciprocal(l_ref[...], approx=True)         # EUP, nearly free
        heads = [acc_ref[h] * inv_l[h] for h in range(n_head)]
        # Single lane-dense (tq, C) store; heads concatenated back to the
        # (B, T, C) layout (no HBM head-merge transpose needed afterwards).
        o_ref[0] = jnp.concatenate(heads, axis=-1).astype(o_ref.dtype)


def causal_attention(q, k, v, n_head):
    """q, k, v: (B, T, C) with heads laid out contiguously along the last dim."""
    B, T, C = q.shape
    hd = C // n_head
    ts, Tp = _seq_tiling(T, _CFG["tile_seq"])
    if Tp != T:
        pad = ((0, 0), (0, Tp - T), (0, 0))
        q, k, v = jnp.pad(q, pad), jnp.pad(k, pad), jnp.pad(v, pad)
    nblk = Tp // ts
    scale = 1.0 / math.sqrt(hd)

    q_spec = pl.BlockSpec((1, ts, C), lambda b, qi, ki: (b, qi, 0))
    kv_spec = pl.BlockSpec((1, ts, C), lambda b, qi, ki: (b, ki, 0))

    out = pl.pallas_call(
        functools.partial(_attn_kernel, n_head=n_head, scale=scale),
        out_shape=jax.ShapeDtypeStruct((B, Tp, C), q.dtype),
        grid_spec=pltpu.PrefetchScalarGridSpec(
            num_scalar_prefetch=0,
            grid=(B, nblk, nblk),
            in_specs=[q_spec, kv_spec, kv_spec],
            out_specs=q_spec,
            scratch_shapes=[
                pltpu.VMEM((n_head, ts, 1), jnp.float32),   # running max
                pltpu.VMEM((n_head, ts, 1), jnp.float32),   # running denom
                pltpu.VMEM((n_head, ts, hd), jnp.float32),  # output accumulator
            ],
        ),
        compiler_params=pltpu.CompilerParams(
            dimension_semantics=("parallel", "parallel", "arbitrary"),
            vmem_limit_bytes=_CFG["vmem_limit"],
        ),
    )(q, k, v)
    return out[:, :T, :] if Tp != T else out


# --------------------------------------------------------------------------
# GPT assembly (inference path: logits for the last position)
# --------------------------------------------------------------------------
def causal_self_attention(x, blk, n_head, residual):
    B, T, C = x.shape
    x2 = x.reshape(B * T, C)
    qkv = linear(x2, blk["attn_w"], blk["attn_b"]).reshape(B, T, 3 * C)
    # chunk order in this module's forward: k, q, v
    k, q, v = jnp.split(qkv, 3, axis=-1)
    y = causal_attention(q, k, v, n_head)               # (B, T, C), heads in-kernel
    # c_proj with the residual add fused into the kernel epilogue.
    out = linear(y.reshape(B * T, C), blk["proj_w"], blk["proj_b"],
                 residual=residual.reshape(B * T, C))
    # attn_dropout / resid_dropout: inference-mode identity.
    return out.reshape(B, T, C)


def gpt_forward(params, idx):
    cfg = params["config"]
    B, T = idx.shape
    assert T <= cfg["block_size"]
    # TODO(synk): token/position embedding gather (and embedding dropout) left to
    # XLA; a scalar-prefetch pl.Element gather kernel is possible but not needed.
    tok = jnp.take(params["wte"], idx, axis=0)           # (B, T, C)
    pos = params["wpe"][:T][None]                        # (1, T, C)
    x = tok + pos
    for blk in params["blocks"]:
        x = causal_self_attention(
            layer_norm(x, blk["ln1_g"], blk["ln1_b"]), blk, cfg["n_head"],
            residual=x)
        x = feed_forward(
            layer_norm(x, blk["ln2_g"], blk["ln2_b"]),
            blk["fc_w"], blk["fc_b"], blk["proj2_w"], blk["proj2_b"],
            residual=x)
    x = layer_norm(x, params["lnf_g"], params["lnf_b"])
    x_last = x[:, -1, :]                                 # (B, C)
    # lm_head tied to wte: contract against (V, C) directly -> no wte.T copy.
    logits = linear(x_last, params["wte"], None, transpose_rhs=True,
                    out_dtype=jnp.float32)
    return logits[:, None, :]                            # (B, 1, vocab)


# --------------------------------------------------------------------------
# Pure-JAX reference (mirrors the PyTorch module semantics)
# --------------------------------------------------------------------------
def _ref_layer_norm(x, g, b):
    m = jnp.mean(x, axis=-1, keepdims=True)
    v = jnp.mean((x - m) ** 2, axis=-1, keepdims=True)
    return (x - m) / jnp.sqrt(v + 1e-5) * g + b


def _ref_gelu(x):
    return 0.5 * x * (1.0 + jax.lax.erf(x * (1.0 / math.sqrt(2.0))))


def gpt_reference(params, idx):
    cfg = params["config"]
    B, T = idx.shape
    C, nH = cfg["n_embd"], cfg["n_head"]
    hd = C // nH
    x = jnp.take(params["wte"], idx, axis=0) + params["wpe"][:T][None]
    for blk in params["blocks"]:
        h = _ref_layer_norm(x, blk["ln1_g"], blk["ln1_b"])
        qkv = h @ blk["attn_w"] + blk["attn_b"]
        k, q, v = jnp.split(qkv, 3, axis=-1)
        q = q.reshape(B, T, nH, hd).transpose(0, 2, 1, 3)
        k = k.reshape(B, T, nH, hd).transpose(0, 2, 1, 3)
        v = v.reshape(B, T, nH, hd).transpose(0, 2, 1, 3)
        att = (q @ k.transpose(0, 1, 3, 2)) / math.sqrt(hd)
        mask = jnp.tril(jnp.ones((T, T), dtype=bool))
        att = jnp.where(mask[None, None], att, -jnp.inf)
        att = jax.nn.softmax(att, axis=-1)
        y = (att @ v).transpose(0, 2, 1, 3).reshape(B, T, C)
        x = x + (y @ blk["proj_w"] + blk["proj_b"])
        h = _ref_layer_norm(x, blk["ln2_g"], blk["ln2_b"])
        f = _ref_gelu(h @ blk["fc_w"] + blk["fc_b"]) @ blk["proj2_w"] + blk["proj2_b"]
        x = x + f
    x = _ref_layer_norm(x, params["lnf_g"], params["lnf_b"])
    return x[:, -1:, :] @ params["wte"].T


# --------------------------------------------------------------------------
# Deterministic parameter construction / dtype casting
# --------------------------------------------------------------------------
def init_params(key, cfg):
    C = cfg["n_embd"]
    V = cfg["vocab_size"]
    H = 4 * C
    keys = iter(jax.random.split(key, 4 + 10 * cfg["n_layer"]))
    std = 0.02
    params = {
        "config": cfg,
        "wte": jax.random.normal(next(keys), (V, C), jnp.float32) * std,
        "wpe": jax.random.normal(next(keys), (cfg["block_size"], C), jnp.float32) * std,
        "lnf_g": jnp.ones((C,), jnp.float32),
        "lnf_b": jnp.zeros((C,), jnp.float32),
        "blocks": [],
    }
    for _ in range(cfg["n_layer"]):
        params["blocks"].append({
            "ln1_g": jnp.ones((C,), jnp.float32),
            "ln1_b": jnp.zeros((C,), jnp.float32),
            "attn_w": jax.random.normal(next(keys), (C, 3 * C), jnp.float32) * std,
            "attn_b": jax.random.normal(next(keys), (3 * C,), jnp.float32) * std,
            "proj_w": jax.random.normal(next(keys), (C, C), jnp.float32) * std,
            "proj_b": jax.random.normal(next(keys), (C,), jnp.float32) * std,
            "ln2_g": jnp.ones((C,), jnp.float32),
            "ln2_b": jnp.zeros((C,), jnp.float32),
            "fc_w": jax.random.normal(next(keys), (C, H), jnp.float32) * std,
            "fc_b": jax.random.normal(next(keys), (H,), jnp.float32) * std,
            "proj2_w": jax.random.normal(next(keys), (H, C), jnp.float32) * std,
            "proj2_b": jax.random.normal(next(keys), (C,), jnp.float32) * std,
        })
    return params


def cast_params(params, dtype):
    """One-time dtype cast (e.g. bf16 for the MXU); 'config' passes through."""
    out = {"config": params["config"]}
    for name, value in params.items():
        if name == "config":
            continue
        out[name] = jax.tree_util.tree_map(lambda a: a.astype(dtype), value)
    return out


if __name__ == "__main__":
    cfg = dict(vocab_size=96, block_size=16, n_layer=2, n_head=4, n_embd=32,
               dropout=0.0, bias=True)
    key = jax.random.PRNGKey(0)
    kp, ki = jax.random.split(key)
    params = init_params(kp, cfg)

    B, T = 2, 8
    idx = jax.random.randint(ki, (B, T), 0, cfg["vocab_size"])

    ref = gpt_reference(params, idx)

    # 1) f32-param pass: tight correctness check of the kernel structure.
    logits_f32 = gpt_forward(params, idx)
    jax.block_until_ready(logits_f32)
    assert logits_f32.shape == (B, 1, cfg["vocab_size"])
    err = float(jnp.max(jnp.abs(logits_f32 - ref)))
    assert err < 5e-3, f"f32 mismatch vs reference: max abs err {err}"

    # 2) bf16-param pass: the production MXU configuration (f32 accumulation).
    params_bf16 = cast_params(params, jnp.bfloat16)
    logits_bf16 = gpt_forward(params_bf16, idx)
    jax.block_until_ready(logits_bf16)
    err_bf16 = float(jnp.max(jnp.abs(logits_bf16.astype(jnp.float32) - ref)))
    assert err_bf16 < 5e-2, f"bf16 mismatch vs reference: max abs err {err_bf16}"

    print("KERNEL_OK")
</pallas_src>

<mosaic_0001>
module attributes {stable_mosaic.version = 11 : i64} {
  func.func @_layernorm_kernel(%arg0: i32, %arg1: memref<16x32xf32, #tpu.memory_space<vmem>>, %arg2: memref<1x32xf32, #tpu.memory_space<vmem>>, %arg3: memref<1x32xf32, #tpu.memory_space<vmem>>, %arg4: memref<16x32xf32, #tpu.memory_space<vmem>>) attributes {dimension_semantics = [#tpu.dimension_semantics<parallel>], iteration_bounds = array<i64: 1>, scalar_prefetch = 0 : i64, scratch_operands = 0 : i64, tpu.core_type = #tpu.core_type<tc>, window_params = [{transform_indices = @transform_0, window_bounds = array<i64: 16, 32>}, {pipeline_mode = #tpu.pipeline_mode<synchronous>, transform_indices = @transform_1, window_bounds = array<i64: 1, 32>}, {pipeline_mode = #tpu.pipeline_mode<synchronous>, transform_indices = @transform_2, window_bounds = array<i64: 1, 32>}, {transform_indices = @transform_3, window_bounds = array<i64: 16, 32>}]} {
    %c0 = arith.constant 0 : index
    %c0_0 = arith.constant 0 : index
    %0 = vector.load %arg1[%c0, %c0_0] : memref<16x32xf32, #tpu.memory_space<vmem>>, vector<16x32xf32>
    %cst = arith.constant dense<0.000000e+00> : vector<16xf32>
    %1 = vector.multi_reduction <add>, %0, %cst [1] : vector<16x32xf32> to vector<16xf32>
    %2 = vector.shape_cast %1 : vector<16xf32> to vector<16x1xf32>
    %cst_1 = arith.constant 3.200000e+01 : f32
    %3 = vector.broadcast %cst_1 : f32 to vector<16x1xf32>
    %4 = arith.divf %2, %3 : vector<16x1xf32>
    %5 = vector.broadcast %4 : vector<16x1xf32> to vector<16x32xf32>
    %6 = arith.subf %0, %5 : vector<16x32xf32>
    %7 = arith.mulf %6, %6 : vector<16x32xf32>
    %cst_2 = arith.constant dense<0.000000e+00> : vector<16xf32>
    %8 = vector.multi_reduction <add>, %7, %cst_2 [1] : vector<16x32xf32> to vector<16xf32>
    %9 = vector.shape_cast %8 : vector<16xf32> to vector<16x1xf32>
    %cst_3 = arith.constant 3.200000e+01 : f32
    %10 = vector.broadcast %cst_3 : f32 to vector<16x1xf32>
    %11 = arith.divf %9, %10 : vector<16x1xf32>
    %cst_4 = arith.constant 9.99999974E-6 : f32
    %12 = vector.broadcast %cst_4 : f32 to vector<16x1xf32>
    %13 = arith.addf %11, %12 : vector<16x1xf32>
    %14 = math.rsqrt %13 : vector<16x1xf32>
    %15 = vector.broadcast %14 : vector<16x1xf32> to vector<16x32xf32>
    %16 = arith.mulf %6, %15 : vector<16x32xf32>
    %c0_5 = arith.constant 0 : index
    %c0_6 = arith.constant 0 : index
    %17 = vector.load %arg2[%c0_5, %c0_6] : memref<1x32xf32, #tpu.memory_space<vmem>>, vector<1x32xf32>
    %18 = vector.broadcast %17 : vector<1x32xf32> to vector<16x32xf32>
    %19 = arith.mulf %16, %18 : vector<16x32xf32>
    %c0_7 = arith.constant 0 : index
    %c0_8 = arith.constant 0 : index
    %20 = vector.load %arg3[%c0_7, %c0_8] : memref<1x32xf32, #tpu.memory_space<vmem>>, vector<1x32xf32>
    %21 = vector.broadcast %20 : vector<1x32xf32> to vector<16x32xf32>
    %22 = arith.addf %19, %21 : vector<16x32xf32>
    %c0_9 = arith.constant 0 : index
    %c0_10 = arith.constant 0 : index
    %23 = vector.load %arg4[%c0_9, %c0_10] : memref<16x32xf32, #tpu.memory_space<vmem>>, vector<16x32xf32>
    tpu.vector_store %arg4[%c0_9, %c0_10], %22 {strides = array<i32>} : memref<16x32xf32, #tpu.memory_space<vmem>>, vector<16x32xf32>,
    return
  }
  func.func @transform_0(%arg0: i32) -> (i32, i32) {
    %c0_i32 = arith.constant 0 : i32
    %c0_i32_0 = arith.constant 0 : i32
    return %arg0, %c0_i32 : i32, i32
  }
  func.func @transform_1(%arg0: i32) -> (i32, i32) {
    %c0_i32 = arith.constant 0 : i32
    %c0_i32_0 = arith.constant 0 : i32
    %c0_i32_1 = arith.constant 0 : i32
    return %c0_i32, %c0_i32_0 : i32, i32
  }
  func.func @transform_2(%arg0: i32) -> (i32, i32) {
    %c0_i32 = arith.constant 0 : i32
    %c0_i32_0 = arith.constant 0 : i32
    %c0_i32_1 = arith.constant 0 : i32
    return %c0_i32, %c0_i32_0 : i32, i32
  }
  func.func @transform_3(%arg0: i32) -> (i32, i32) {
    %c0_i32 = arith.constant 0 : i32
    %c0_i32_0 = arith.constant 0 : i32
    return %arg0, %c0_i32 : i32, i32
  }
}

</mosaic_0001>

<llo_original>
// kernel: tpu_custom_call.1
$region0: #{tpu_custom_call.1}
  #allocation0 [shape = 'u32[]', space=smem, size = 0x4, offset = 0x4, fixed_abs, tag = 'smem constant byte address 0x4 - core index']
  #allocation1 [shape = 'u32[72,128]{1,0:T(1,128)}', space=vmem, size = 0x9000, scoped, tag = 'internal scratch']
  %s0 = inlined_call_operand.hbm [shape: f32[16,32], index: 0, kind: input, shape index: {}]
  %s1 = inlined_call_operand.hbm [shape: f32[1,32], index: 1, kind: input, shape index: {}]
  %s2 = inlined_call_operand.vmem [shape: f32[1,32], index: 2, kind: input, shape index: {}]
  %s3 = inlined_call_operand.hbm [shape: f32[16,32], index: 3, kind: output, shape index: {}]
  %s4 = sld [smem:[#allocation0]]
  $region30: #{tpu_custom_call.1} parent=0
    _
  %s6 = ssub.s32 1, %s4
  %s7 = scalar_select 0, %s6, %s4
  $region1: #{tpu_custom_call.1} parent=0
    #allocation2 [shape = 'u8[8192]{0}', space=vmem, size = 0x2000, scoped, tag = 'input window, operand 0, single buffered']
    #allocation3 [shape = 's32[1]{0}', space=sflag, size = 0x4, scoped, tag = 'scoped memory for tpu_custom_call.1']
    #allocation4 [shape = 's32[1]{0}', space=sflag, size = 0x4, scoped, tag = 'scoped memory for tpu_custom_call.1']
    #allocation5 [shape = 'u8[512]{0}', space=vmem, size = 0x400, scoped, tag = 'input window, operand 1, single buffered']
    #allocation6 [shape = 's32[1]{0}', space=sflag, size = 0x4, scoped, tag = 'scoped memory for tpu_custom_call.1']
    #allocation7 [shape = 'u8[8192]{0}', space=vmem, size = 0x2000, scoped, tag = 'output window, operand 0, single buffered']
    %8 = vsyncpa [#allocation3], 0
    %9 = vsyncpa [#allocation6], 0
    %10 = vsyncpa [#allocation4], 0
    // Predicated region
    $region2: #{tpu_custom_call.1} parent=1 // pred_check
      _
    $region3: #{tpu_custom_call.1} parent=1 // pred_check_branch
      %12 = sbr.rel (0) target = $region5
    $region4: #{tpu_custom_call.1} parent=1 // pred_region
      %14 = vsyncadd [#allocation3], 0
      %s15 = sshll.u32 %s0, 4
      %s16 = int_to_ptr.hbm [resolvable:$true] %s15
      %s17 = sshll.u32 [#allocation2], 4
      %s18 = int_to_ptr.vmem [resolvable:$true] %s17
      %23 = dma.hbm_to_vmem [thread:$0]  %s16, 256, %s18, [#allocation3], 128, 128, 8
    $region5: #{tpu_custom_call.1} parent=1 // pred_fallthru
      _
    // Predicated region
    $region6: #{tpu_custom_call.1} parent=1 // pred_check
      _
    $region7: #{tpu_custom_call.1} parent=1 // pred_check_branch
      %25 = sbr.rel (0) target = $region9
    $region8: #{tpu_custom_call.1} parent=1 // pred_region
      %27 = vsyncadd [#allocation6], 0
      %s29 = sshll.u32 %s1, 4
      %s30 = int_to_ptr.hbm [resolvable:$true] %s29
      %s31 = sshll.u32 [#allocation5], 4
      %s32 = int_to_ptr.vmem [resolvable:$true] %s31
      %34 = dma.hbm_to_vmem [thread:$0]  %s30, 16, %s32, [#allocation6]
    $region9: #{tpu_custom_call.1} parent=1 // pred_fallthru
      _
    // Predicated region
    $region10: #{tpu_custom_call.1} parent=1 // pred_check
      _
    $region11: #{tpu_custom_call.1} parent=1 // pred_check_branch
      %36 = sbr.rel (0) target = $region13
    $region12: #{tpu_custom_call.1} parent=1 // pred_region
      _
    $region13: #{tpu_custom_call.1} parent=1 // pred_fallthru
      _
    // Predicated region
    $region14: #{tpu_custom_call.1} parent=1 // pred_check
      _
    $region15: #{tpu_custom_call.1} parent=1 // pred_check_branch
      %38 = sbr.rel (0) target = $region17
    $region16: #{tpu_custom_call.1} parent=1 // pred_region
      %40 = dma.done [#allocation3], 256
    $region17: #{tpu_custom_call.1} parent=1 // pred_fallthru
      _
    // Predicated region
    $region18: #{tpu_custom_call.1} parent=1 // pred_check
      _
    $region19: #{tpu_custom_call.1} parent=1 // pred_check_branch
      %42 = sbr.rel (0) target = $region21
    $region20: #{tpu_custom_call.1} parent=1 // pred_region
      %44 = dma.done [#allocation6], 16
    $region21: #{tpu_custom_call.1} parent=1 // pred_fallthru
      _
    %v45 = vld [vmem:[#allocation2] sm:$0xff]
    %v46 = vld [vmem:[#allocation2 + $0x8] sm:$0xff]
    %vm47 = vcmask 261120
    %v48 = vsel %vm47, %v45, 0.0
    %49 = vadd.xlane.f32.xlu0 %v48
    %v50 = vpop.xlane.xlu0 %49
    %v51 = vsel %vm47, %v46, 0.0
    %52 = vadd.xlane.f32.xlu0 %v51
    %v53 = vpop.xlane.xlu0 %52
    %v54 = vrcp.pop 32.0
    %v55 = vmul.f32 32.0, %v54
    %v56 = vsub.f32 1.0, %v55
    %v57 = vmul.f32 %v54, %v56
    %v58 = vadd.f32 %v54, %v57
    %vm59 = vweird.f32 %v54
    %v60 = vsel %vm59, %v54, %v58
    %v61 = vmul.f32 %v50, %v60
    %v62 = vmul.f32 %v53, %v60
    %v63 = vsub.f32 %v45, %v61
    %v64 = vsub.f32 %v46, %v62
    %v65 = vmul.f32 %v63, %v63
    %v66 = vmul.f32 %v64, %v64
    %v67 = vsel %vm47, %v65, 0.0
    %68 = vadd.xlane.f32.xlu0 %v67
    %v69 = vpop.xlane.xlu0 %68
    %v70 = vsel %vm47, %v66, 0.0
    %71 = vadd.xlane.f32.xlu0 %v70
    %v72 = vpop.xlane.xlu0 %71
    %v73 = vmul.f32 %v69, %v60
    %v74 = vmul.f32 %v72, %v60
    %v75 = vadd.f32 %v73, 1e-05
    %v76 = vadd.f32 %v74, 1e-05
    %v77 = vrsqrt.pop %v75
    %v78 = vmul.f32 %v77, %v75
    %v79 = vmul.f32 %v78, %v77
    %v80 = vmul.f32 0.5, %v79
    %v81 = vsub.f32 1.5, %v80
    %v82 = vmul.f32 %v77, %v81
    %vm83 = vweird.f32 %v75
    %vm84 = vweird.f32 %v77
    %vm85 = vmor %vm83, %vm84
    %v86 = vsel %vm85, %v77, %v82
    %v87 = vrsqrt.pop %v76
    %v88 = vmul.f32 %v87, %v76
    %v89 = vmul.f32 %v88, %v87
    %v90 = vmul.f32 0.5, %v89
    %v91 = vsub.f32 1.5, %v90
    %v92 = vmul.f32 %v87, %v91
    %vm93 = vweird.f32 %v76
    %vm94 = vweird.f32 %v87
    %vm95 = vmor %vm93, %vm94
    %v96 = vsel %vm95, %v87, %v92
    %v97 = vmul.f32 %v63, %v86
    %v98 = vmul.f32 %v64, %v96
    %v99 = vld [vmem:[#allocation5] sm:$0x1]
    %v101 = vperm.slane %v99, 0
    %v103 = vmul.f32 %v97, %v101
    %v104 = vmul.f32 %v98, %v101
    %v105 = vld [vmem:[%s2] sm:$0x1]
    %v107 = vperm.slane %v105, 0
    %v109 = vadd.f32 %v103, %v107
    %v110 = vadd.f32 %v104, %v107
    %111 = vst.msk [vmem:[#allocation7] sm:$0xff] %vm47, %v109
    %112 = vst.msk [vmem:[#allocation7 + $0x8] sm:$0xff] %vm47, %v110
    // Predicated region
    $region22: #{tpu_custom_call.1} parent=1 // pred_check
      _
    $region23: #{tpu_custom_call.1} parent=1 // pred_check_branch
      %114 = sbr.rel (0) target = $region25
    $region24: #{tpu_custom_call.1} parent=1 // pred_region
      %116 = vsyncadd [#allocation4], 0
      %s117 = sshll.u32 [#allocation7], 4
      %s118 = int_to_ptr.vmem [resolvable:$true] %s117
      %s119 = sshll.u32 %s3, 4
      %s120 = int_to_ptr.hbm [resolvable:$true] %s119
      %125 = dma.vmem_to_hbm [thread:$0]  %s118, 256, %s120, [#allocation4], 128, 128, 8
    $region25: #{tpu_custom_call.1} parent=1 // pred_fallthru
      _
    // Predicated region
    $region26: #{tpu_custom_call.1} parent=1 // pred_check
      _
    $region27: #{tpu_custom_call.1} parent=1 // pred_check_branch
      %127 = sbr.rel (0) target = $region29
    $region28: #{tpu_custom_call.1} parent=1 // pred_region
      %129 = dma.done [#allocation4], 256
    $region29: #{tpu_custom_call.1} parent=1 // pred_fallthru
      _
    %130 = vsyncpa [#allocation3], 1
    %131 = vsyncpa [#allocation6], 1
    %132 = vsyncpa [#allocation4], 1

</llo_original>
